<compile_context>
chip_gen: v6e
topology: v6e:2x2x1
jax: 0.10.0
libtpu: 0.0.40
codegen_flags: <defaults>
</compile_context>

<pallas_src>
import functools

import jax
import jax.numpy as jnp
from jax.experimental import pallas as pl
from jax.experimental.pallas import tpu as pltpu

# VMEM budget used to size the batch tile (x/out double buffers + f32 matmul
# result + single-buffered fused weight).  Kept well under the smallest
# generation target (v7x: 64 MiB physical).
_TILE_VMEM_BUDGET = 40 << 20
_VMEM_LIMIT_CAP = 56 << 20


def _round_up(v, m):
    return ((v + m - 1) // m) * m


def highway_kernel(x_ref, w_ref, b_ref, o_ref, *, approx_gate):
    """One batch tile of the highway forward pass.

    x_ref: (TILE_B, E)   input tile (native/MXU dtype, fed straight to the MXU)
    w_ref: (E, 2E)       fused [Wp^T | Wg^T], VMEM-resident, single-buffered
    b_ref: (1, 2E)       fused [bp | bg] in f32
    o_ref: (TILE_B, E)   output tile
    """
    E = o_ref.shape[-1]
    x = x_ref[...]

    # Single fused lane-dense matmul: (TILE_B, E) @ (E, 2E) -> (TILE_B, 2E),
    # f32 accumulation on the MXU, bias add in f32.
    y = jnp.dot(x, w_ref[...], preferred_element_type=jnp.float32) + b_ref[...]

    # NOTE: the y[:, :E] / y[:, E:] slices are free lane-aligned views only
    # when E % 128 == 0; for other E, pad each fused-weight half to 128.
    proj = jnp.maximum(y[:, :E], 0.0)          # relu(x @ Wp^T + bp)
    zg = y[:, E:]
    if approx_gate:
        # sigmoid via EUP exp + EUP approximate reciprocal: keeps the VALU
        # free for the relu/blend (gate error ~1e-3-level).
        gate = pl.reciprocal(1.0 + jnp.exp(-zg), approx=True)
    else:
        gate = jax.nn.sigmoid(zg)              # exact path

    # gate*proj + (1-gate)*x  ==  x + gate*(proj - x)
    xf = x.astype(jnp.float32)
    o_ref[...] = (xf + gate * (proj - xf)).astype(o_ref.dtype)


def _choose_tile_b(batch, embed, x_bytes, out_bytes, w_bytes, requested):
    """Largest multiple-of-8 batch tile fitting the VMEM budget; keep >=2 grid
    steps (when batch allows) so v7x's two TensorCores both get work."""
    per_row = 2 * embed * x_bytes + 2 * embed * out_bytes + 2 * embed * 4
    fixed = 2 * embed * embed * w_bytes + 2 * embed * 4
    budget = _TILE_VMEM_BUDGET - fixed
    if budget >= 8 * per_row:
        max_rows = max(8, ((budget // per_row) // 8) * 8)
    else:
        max_rows = 8
    tile = max(8, (min(requested, max_rows, _round_up(batch, 8)) // 8) * 8)
    if pl.cdiv(batch, tile) < 2 and batch > 8:
        tile = max(8, _round_up(pl.cdiv(batch, 2), 8))
    vmem_limit = int(min(max(fixed + tile * per_row + (4 << 20), 32 << 20),
                         _VMEM_LIMIT_CAP))
    return tile, vmem_limit


def highway_forward(x, wp, bp, wg, bg, *, tile_b=1024, mxu_dtype=None,
                    approx_gate=True):
    """Highway forward pass (eval mode, dropout = identity).

    x:        (B, E)  input (f32 or bf16)
    wp, wg:   (E, E)  PyTorch nn.Linear weights, layout (out_features, in_features)
    bp, bg:   (E,)    biases
    mxu_dtype: optional dtype for the MXU operands (e.g. jnp.bfloat16);
               default keeps the input dtype (f32 test stays bit-tight).
    """
    B, E = x.shape
    out_dtype = x.dtype
    mxu_dtype = jnp.dtype(out_dtype if mxu_dtype is None else mxu_dtype)

    # Fuse the two Linears into one lane-dense matmul RHS / bias row:
    #   y = x @ [Wp^T | Wg^T] + [bp | bg]
    x_in = x.astype(mxu_dtype)
    w_fused = jnp.concatenate([wp.T, wg.T], axis=1).astype(mxu_dtype)      # (E, 2E)
    b_fused = jnp.concatenate([bp, bg]).reshape(1, 2 * E).astype(jnp.float32)

    x_bytes = jnp.dtype(mxu_dtype).itemsize
    o_bytes = jnp.dtype(out_dtype).itemsize
    tile_b, vmem_limit = _choose_tile_b(B, E, x_bytes, o_bytes, x_bytes, tile_b)

    # Ragged last block handled by Pallas block masking -> no jnp.pad / out[:B]
    # extra HBM passes.
    num_blocks = pl.cdiv(B, tile_b)

    cost = pl.CostEstimate(
        flops=2 * B * E * 2 * E + 8 * B * E,
        transcendentals=2 * B * E,   # exp (+ approx reciprocal) per gate element
        bytes_accessed=(B * E * x_bytes + 2 * E * E * x_bytes
                        + 2 * E * 4 + B * E * o_bytes),
    )

    # TODO(synk): for very large E (>= ~2048 f32 / ~4096 bf16) the resident
    # (E, 2E) fused weight no longer fits v7x VMEM next to the batch tiles;
    # add a K-/N-tiled grid axis with an f32 accumulator + pl.when finalize.
    out = pl.pallas_call(
        functools.partial(highway_kernel, approx_gate=approx_gate),
        out_shape=jax.ShapeDtypeStruct((B, E), out_dtype),
        grid=(num_blocks,),
        in_specs=[
            # x: streamed per batch tile (double-buffered by the pipeline).
            pl.BlockSpec((tile_b, E), lambda i: (i, 0)),
            # Fused weight / bias: constant index_map -> VMEM-resident across
            # the grid, single-buffered so the saved VMEM buys a bigger tile.
            pl.BlockSpec((E, 2 * E), lambda i: (0, 0),
                         pipeline_mode=pl.Buffered(1)),
            pl.BlockSpec((1, 2 * E), lambda i: (0, 0),
                         pipeline_mode=pl.Buffered(1)),
        ],
        out_specs=pl.BlockSpec((tile_b, E), lambda i: (i, 0)),
        compiler_params=pltpu.CompilerParams(
            dimension_semantics=("parallel",),
            vmem_limit_bytes=vmem_limit,
        ),
        cost_estimate=cost,
    )(x_in, w_fused, b_fused)

    return out


def highway_reference(x, wp, bp, wg, bg):
    proj = jax.nn.relu(x @ wp.T + bp)
    gate = jax.nn.sigmoid(x @ wg.T + bg)
    return gate * proj + (1.0 - gate) * x


if __name__ == "__main__":
    batch_size = 16
    embed_size = 128
    dropout_rate = 0.3  # eval-mode forward: dropout is identity

    key = jax.random.PRNGKey(0)
    kx, kwp, kbp, kwg, kbg = jax.random.split(key, 5)

    # Deterministic synthetic parameters in PyTorch nn.Linear layout:
    # weight (out_features, in_features), bias (out_features,).
    bound = 1.0 / jnp.sqrt(embed_size)
    x = jax.random.normal(kx, (batch_size, embed_size), dtype=jnp.float32)
    wp = jax.random.uniform(kwp, (embed_size, embed_size), jnp.float32, -bound, bound)
    bp = jax.random.uniform(kbp, (embed_size,), jnp.float32, -bound, bound)
    wg = jax.random.uniform(kwg, (embed_size, embed_size), jnp.float32, -bound, bound)
    bg = jax.random.uniform(kbg, (embed_size,), jnp.float32, -bound, bound)

    ref = highway_reference(x, wp, bp, wg, bg)

    # Exact-gate path: tight agreement with the f32 reference.
    # Small tile so the toy batch still exercises a multi-step parallel grid.
    out_exact = highway_forward(x, wp, bp, wg, bg, tile_b=8, approx_gate=False)
    out_exact = jax.block_until_ready(out_exact)
    assert out_exact.shape == (batch_size, embed_size)
    assert jnp.allclose(out_exact, ref, atol=1e-4, rtol=1e-4), "exact-gate mismatch"

    # Default fast path: EUP approximate reciprocal in the gate (~1e-3-level
    # gate error), so the check tolerance is loosened accordingly.
    out_fast = jax.block_until_ready(highway_forward(x, wp, bp, wg, bg, tile_b=8))
    assert out_fast.shape == (batch_size, embed_size)
    assert jnp.allclose(out_fast, ref, atol=2e-2, rtol=2e-2), "approx-gate mismatch"

    print("KERNEL_OK")
</pallas_src>

<mosaic_0001>
module attributes {stable_mosaic.version = 11 : i64} {
  func.func @highway_kernel(%arg0: i32, %arg1: memref<8x128xf32, #tpu.memory_space<vmem>>, %arg2: memref<128x256xf32, #tpu.memory_space<vmem>>, %arg3: memref<1x256xf32, #tpu.memory_space<vmem>>, %arg4: memref<8x128xf32, #tpu.memory_space<vmem>>) attributes {dimension_semantics = [#tpu.dimension_semantics<parallel>], iteration_bounds = array<i64: 2>, scalar_prefetch = 0 : i64, scratch_operands = 0 : i64, tpu.core_type = #tpu.core_type<tc>, window_params = [{transform_indices = @transform_0, window_bounds = array<i64: 8, 128>}, {pipeline_mode = #tpu.pipeline_mode<synchronous>, transform_indices = @transform_1, window_bounds = array<i64: 128, 256>}, {pipeline_mode = #tpu.pipeline_mode<synchronous>, transform_indices = @transform_2, window_bounds = array<i64: 1, 256>}, {transform_indices = @transform_3, window_bounds = array<i64: 8, 128>}]} {
    %c0 = arith.constant 0 : index
    %c0_0 = arith.constant 0 : index
    %0 = vector.load %arg1[%c0, %c0_0] : memref<8x128xf32, #tpu.memory_space<vmem>>, vector<8x128xf32>
    %c0_1 = arith.constant 0 : index
    %c0_2 = arith.constant 0 : index
    %1 = vector.load %arg2[%c0_1, %c0_2] : memref<128x256xf32, #tpu.memory_space<vmem>>, vector<128x256xf32>
    %cst = arith.constant dense<0.000000e+00> : vector<8x256xf32>
    %2 = tpu.matmul %0, %1, %cst {dimension_numbers = #tpu.dot_dimension_numbers<[1], [0], [0], [1], [0, 0, 1, 1], [], []>} : vector<8x128xf32>, vector<128x256xf32>, vector<8x256xf32> -> vector<8x256xf32>
    %c0_3 = arith.constant 0 : index
    %c0_4 = arith.constant 0 : index
    %3 = vector.load %arg3[%c0_3, %c0_4] : memref<1x256xf32, #tpu.memory_space<vmem>>, vector<1x256xf32>
    %4 = vector.broadcast %3 : vector<1x256xf32> to vector<8x256xf32>
    %5 = arith.addf %2, %4 : vector<8x256xf32>
    %6 = vector.extract_strided_slice %5 {offsets = [0, 0], sizes = [8, 128], strides = [1, 1]} : vector<8x256xf32> to vector<8x128xf32>
    %cst_5 = arith.constant 0.000000e+00 : f32
    %7 = vector.broadcast %cst_5 : f32 to vector<8x128xf32>
    %8 = arith.maximumf %6, %7 : vector<8x128xf32>
    %9 = vector.extract_strided_slice %5 {offsets = [0, 128], sizes = [8, 128], strides = [1, 1]} : vector<8x256xf32> to vector<8x128xf32>
    %10 = arith.negf %9 : vector<8x128xf32>
    %11 = math.exp %10 : vector<8x128xf32>
    %cst_6 = arith.constant 1.000000e+00 : f32
    %12 = vector.broadcast %cst_6 : f32 to vector<8x128xf32>
    %13 = arith.addf %12, %11 : vector<8x128xf32>
    %14 = arith.divf %12, %13 : vector<8x128xf32>
    %15 = arith.subf %8, %0 : vector<8x128xf32>
    %16 = arith.mulf %14, %15 : vector<8x128xf32>
    %17 = arith.addf %0, %16 : vector<8x128xf32>
    %c0_7 = arith.constant 0 : index
    %c0_8 = arith.constant 0 : index
    %18 = vector.load %arg4[%c0_7, %c0_8] : memref<8x128xf32, #tpu.memory_space<vmem>>, vector<8x128xf32>
    tpu.vector_store %arg4[%c0_7, %c0_8], %17 {strides = array<i32>} : memref<8x128xf32, #tpu.memory_space<vmem>>, vector<8x128xf32>,
    return
  }
  func.func @transform_0(%arg0: i32) -> (i32, i32) {
    %c0_i32 = arith.constant 0 : i32
    %c0_i32_0 = arith.constant 0 : i32
    return %arg0, %c0_i32 : i32, i32
  }
  func.func @transform_1(%arg0: i32) -> (i32, i32) {
    %c0_i32 = arith.constant 0 : i32
    %c0_i32_0 = arith.constant 0 : i32
    %c0_i32_1 = arith.constant 0 : i32
    return %c0_i32, %c0_i32_0 : i32, i32
  }
  func.func @transform_2(%arg0: i32) -> (i32, i32) {
    %c0_i32 = arith.constant 0 : i32
    %c0_i32_0 = arith.constant 0 : i32
    %c0_i32_1 = arith.constant 0 : i32
    return %c0_i32, %c0_i32_0 : i32, i32
  }
  func.func @transform_3(%arg0: i32) -> (i32, i32) {
    %c0_i32 = arith.constant 0 : i32
    %c0_i32_0 = arith.constant 0 : i32
    return %arg0, %c0_i32 : i32, i32
  }
}

</mosaic_0001>

<llo_original>
// kernel: tpu_custom_call.1
$region0: #{tpu_custom_call.1}
  #allocation0 [shape = 'u32[]', space=smem, size = 0x4, offset = 0x4, fixed_abs, tag = 'smem constant byte address 0x4 - core index']
  #allocation1 [shape = 'u32[144,128]{1,0:T(1,128)}', space=vmem, size = 0x12000, scoped, tag = 'internal scratch']
  %s0 = inlined_call_operand.hbm [shape: f32[16,128], index: 0, kind: input, shape index: {}]
  %s1 = inlined_call_operand.hbm [shape: f32[128,256], index: 1, kind: input, shape index: {}]
  %s2 = inlined_call_operand.vmem [shape: f32[1,256], index: 2, kind: input, shape index: {}]
  %s3 = inlined_call_operand.hbm [shape: f32[16,128], index: 3, kind: output, shape index: {}]
  %s4 = sld [smem:[#allocation0]]
  $region53: #{tpu_custom_call.1} parent=0
    _
  %s6 = ssub.s32 1, %s4
  %s7 = scalar_select 0, %s6, %s4
  $region1: #{tpu_custom_call.1} parent=0
    #allocation2 [shape = 'u8[8192]{0}', space=vmem, size = 0x2000, scoped, tag = 'input window, operand 0']
    #allocation3 [shape = 's32[2]{0}', space=sflag, size = 0x8, scoped, tag = 'scoped memory for tpu_custom_call.1']
    #allocation4 [shape = 's32[2]{0}', space=sflag, size = 0x8, scoped, tag = 'scoped memory for tpu_custom_call.1']
    #allocation5 [shape = 'u8[131072]{0}', space=vmem, size = 0x20000, scoped, tag = 'input window, operand 1, single buffered']
    #allocation6 [shape = 's32[1]{0}', space=sflag, size = 0x4, scoped, tag = 'scoped memory for tpu_custom_call.1']
    #allocation7 [shape = 'u8[8192]{0}', space=vmem, size = 0x2000, scoped, tag = 'output window, operand 0']
    %8 = vsyncpa [#allocation3], 0
    %s9 = scalar_lea.sflag [#allocation3], 1
    %10 = vsyncpa %s9, 0
    %11 = vsyncpa [#allocation6], 0
    %12 = vsyncpa [#allocation4], 0
    %s13 = scalar_lea.sflag [#allocation4], 1
    %14 = vsyncpa %s13, 0
    loop: start=0, step=1, limit=4
    $region2: #{tpu_custom_call.1} parent=1 // loop_pre_header
      _
    $region3: #{tpu_custom_call.1} parent=1 // loop_header
      %s16 = sphi 0, %s20
      %p17 = scmp.ge.s32.totalorder %s16, 4
      %s26 = sphi 0, %s28
      %s29 = sphi 0, %s26
      %s30 = sphi 0, %s29
      %s46 = sphi 0, %s30
      %s50 = sphi 0, %s50
      %s52 = sphi 0, %s50
      %s53 = sphi 0, %s52
      %s67 = sphi 0, %s53
      %s71 = sphi 0, %s71
      %s73 = sphi 0, %s71
      %s74 = sphi 0, %s73
      %s88 = sphi 0, %s74
      %s94 = sphi 0, %s96
      %s97 = sphi 0, %s94
      %s98 = sphi 0, %s97
      %s114 = sphi 0, %s98
    $region4: #{tpu_custom_call.1} parent=1 // loop_header_branch
      %19 = sbr.rel (%p17) target = $region8
    $region5: #{tpu_custom_call.1} parent=1 // loop_body
      %s21 = ssub.s32 %s16, 1
      %s22 = ssub.s32 %s16, 2
      %s23 = sadd.s32 %s16, 1
      %s24 = ssub.s32 %s16, %s23
      %p25 = scmp.eq.s32.totalorder %s24, 0
      %s27 = sadd.s32 %s26, 1
      %s28 = scalar_select %p25, %s26, %s27
      %p31 = pneg %p25
      %p32 = scmp.eq.s32.totalorder %s16, 1
      %p33 = por %p31, %p32
      %p34 = scmp.ne.s32.totalorder %s26, %s29
      %p35 = scmp.eq.s32.totalorder %s16, 0
      %p36 = por %p34, %p35
      %p37 = scmp.ne.s32.totalorder %s26, %s29
      %p38 = scmp.eq.s32.totalorder %s21, 1
      %p39 = por %p37, %p38
      %p40 = scmp.ne.s32.totalorder %s29, %s30
      %p41 = scmp.eq.s32.totalorder %s21, 0
      %p42 = por %p40, %p41
      %p43 = scmp.ne.s32.totalorder %s29, %s30
      %p44 = scmp.eq.s32.totalorder %s22, 1
      %p45 = por %p43, %p44
      %p47 = scmp.ne.s32.totalorder %s30, %s46
      %p48 = scmp.eq.s32.totalorder %s22, 0
      %p49 = por %p47, %p48
      %s51 = sadd.s32 %s50, 1
      %p54 = scmp.eq.s32.totalorder %s16, 1
      %p55 = scmp.ne.s32.totalorder %s50, %s52
      %p56 = scmp.eq.s32.totalorder %s16, 0
      %p57 = por %p55, %p56
      %p58 = scmp.ne.s32.totalorder %s50, %s52
      %p59 = scmp.eq.s32.totalorder %s21, 1
      %p60 = por %p58, %p59
      %p61 = scmp.ne.s32.totalorder %s52, %s53
      %p62 = scmp.eq.s32.totalorder %s21, 0
      %p63 = por %p61, %p62
      %p64 = scmp.ne.s32.totalorder %s52, %s53
      %p65 = scmp.eq.s32.totalorder %s22, 1
      %p66 = por %p64, %p65
      %p68 = scmp.ne.s32.totalorder %s53, %s67
      %p69 = scmp.eq.s32.totalorder %s22, 0
      %p70 = por %p68, %p69
      %s72 = sadd.s32 %s71, 1
      %p75 = scmp.eq.s32.totalorder %s16, 1
      %p76 = scmp.ne.s32.totalorder %s71, %s73
      %p77 = scmp.eq.s32.totalorder %s16, 0
      %p78 = por %p76, %p77
      %p79 = scmp.ne.s32.totalorder %s71, %s73
      %p80 = scmp.eq.s32.totalorder %s21, 1
      %p81 = por %p79, %p80
      %p82 = scmp.ne.s32.totalorder %s73, %s74
      %p83 = scmp.eq.s32.totalorder %s21, 0
      %p84 = por %p82, %p83
      %p85 = scmp.ne.s32.totalorder %s73, %s74
      %p86 = scmp.eq.s32.totalorder %s22, 1
      %p87 = por %p85, %p86
      %p89 = scmp.ne.s32.totalorder %s74, %s88
      %p90 = scmp.eq.s32.totalorder %s22, 0
      %p91 = por %p89, %p90
      %s92 = ssub.s32 %s16, %s23
      %p93 = scmp.eq.s32.totalorder %s92, 0
      %s95 = sadd.s32 %s94, 1
      %s96 = scalar_select %p93, %s94, %s95
      %p99 = pneg %p93
      %p100 = scmp.eq.s32.totalorder %s16, 1
      %p101 = por %p99, %p100
      %p102 = scmp.ne.s32.totalorder %s94, %s97
      %p103 = scmp.eq.s32.totalorder %s16, 0
      %p104 = por %p102, %p103
      %p105 = scmp.ne.s32.totalorder %s94, %s97
      %p106 = scmp.eq.s32.totalorder %s21, 1
      %p107 = por %p105, %p106
      %p108 = scmp.ne.s32.totalorder %s97, %s98
      %p109 = scmp.eq.s32.totalorder %s21, 0
      %p110 = por %p108, %p109
      %p111 = scmp.ne.s32.totalorder %s97, %s98
      %p112 = scmp.eq.s32.totalorder %s22, 1
      %p113 = por %p111, %p112
      %p115 = scmp.ne.s32.totalorder %s98, %s114
      %p116 = scmp.eq.s32.totalorder %s22, 0
      %p117 = por %p115, %p116
      %p118 = scmp.le.s32.totalorder 1, %s16
      %p119 = scmp.lt.s32.totalorder %s16, 3
      %p120 = pnand %p118, %p119
      %p121 = pneg %p120
      // Predicated region
      $region9: #{tpu_custom_call.1} parent=5 // pred_check
        _
      $region10: #{tpu_custom_call.1} parent=5 // pred_check_branch
        %123 = sbr.rel (%p120) target = $region12
      $region11: #{tpu_custom_call.1} parent=5 // pred_region
        %s124 = ssub.s32 %s16, 1
        // Predicated region
        $region13: #{tpu_custom_call.1} parent=11 // pred_check
          %p125 = pneg %p63
        $region14: #{tpu_custom_call.1} parent=11 // pred_check_branch
          %127 = sbr.rel (%p125) target = $region16
        $region15: #{tpu_custom_call.1} parent=11 // pred_region
          %s129 = ssub.s32 4096, 4096
          %130 = vsyncadd [#allocation6], %s129
          %s131 = sshll.u32 [#allocation5], 4
          %s132 = int_to_ptr.vmem [resolvable:$true] %s131
          %137 = dma.hbm_to_vmem [thread:$0]  %s1, 4096, %s132, [#allocation6], 256, 256, 16
        $region16: #{tpu_custom_call.1} parent=11 // pred_fallthru
          _
        // Predicated region
        $region17: #{tpu_custom_call.1} parent=11 // pred_check
          %p138 = pneg %p84
        $region18: #{tpu_custom_call.1} parent=11 // pred_check_branch
          %140 = sbr.rel (%p138) target = $region20
        $region19: #{tpu_custom_call.1} parent=11 // pred_region
          _
        $region20: #{tpu_custom_call.1} parent=11 // pred_fallthru
          _
      $region12: #{tpu_custom_call.1} parent=5 // pred_fallthru
        _
      %p141 = scmp.lt.s32.totalorder %s16, 2
      // Predicated region
      $region21: #{tpu_custom_call.1} parent=5 // pred_check
        %p142 = pneg %p141
      $region22: #{tpu_custom_call.1} parent=5 // pred_check_branch
        %144 = sbr.rel (%p142) target = $region24
      $region23: #{tpu_custom_call.1} parent=5 // pred_region
        // Predicated region
        $region25: #{tpu_custom_call.1} parent=23 // pred_check
          %p145 = pneg %p36
        $region26: #{tpu_custom_call.1} parent=23 // pred_check_branch
          %147 = sbr.rel (%p145) target = $region28
        $region27: #{tpu_custom_call.1} parent=23 // pred_region
          %s148 = sand.u32 %s26, 1
          %s149 = scalar_lea.sflag [#allocation3], %s148
          %s150 = sand.u32 %s26, 1
          %s151 = smul.addr %s150, 8
          %s152 = scalar_lea.vmem [#allocation2], %s151
          %s154 = ssub.s32 128, 128
          %155 = vsyncadd %s149, %s154
          %s156 = smul.addr %s16, 128
          %s157 = scalar_lea.hbm %s0, %s156
          %s159 = sshll.u32 %s152, 4
          %s160 = int_to_ptr.vmem [resolvable:$true] %s159
          %162 = dma.hbm_to_vmem [thread:$0]  %s157, 128, %s160, %s149
        $region28: #{tpu_custom_call.1} parent=23 // pred_fallthru
          _
      $region24: #{tpu_custom_call.1} parent=5 // pred_fallthru
        _
      %p163 = scmp.le.s32.totalorder 1, %s16
      %p164 = scmp.lt.s32.totalorder %s16, 3
      %p165 = pnand %p163, %p164
      %p166 = pneg %p165
      // Predicated region
      $region29: #{tpu_custom_call.1} parent=5 // pred_check
        _
      $region30: #{tpu_custom_call.1} parent=5 // pred_check_branch
        %168 = sbr.rel (%p165) target = $region32
      $region31: #{tpu_custom_call.1} parent=5 // pred_region
        %s169 = ssub.s32 %s16, 1
        %s170 = sand.u32 %s29, 1
        %s171 = scalar_lea.sflag [#allocation3], %s170
        %s172 = sand.u32 %s29, 1
        %s173 = smul.addr %s172, 8
        %s174 = scalar_lea.vmem [#allocation2], %s173
        // Predicated region
        $region33: #{tpu_custom_call.1} parent=31 // pred_check
          %p175 = pneg %p42
        $region34: #{tpu_custom_call.1} parent=31 // pred_check_branch
          %177 = sbr.rel (%p175) target = $region36
        $region35: #{tpu_custom_call.1} parent=31 // pred_region
          %178 = dma.done %s171, 128
        $region36: #{tpu_custom_call.1} parent=31 // pred_fallthru
          _
        // Predicated region
        $region37: #{tpu_custom_call.1} parent=31 // pred_check
          %p179 = pneg %p63
        $region38: #{tpu_custom_call.1} parent=31 // pred_check_branch
          %181 = sbr.rel (%p179) target = $region40
        $region39: #{tpu_custom_call.1} parent=31 // pred_region
          %182 = dma.done [#allocation6], 4096
        $region40: #{tpu_custom_call.1} parent=31 // pred_fallthru
          _
        %s183 = sand.u32 %s29, 1
        %s184 = scalar_lea.sflag [#allocation3], %s183
        %s185 = sand.u32 %s29, 1
        %s186 = smul.addr %s185, 8
        %s187 = scalar_lea.vmem [#allocation2], %s186
        %p188 = pneg %p42
        %p189 = pneg %p39
        %p190 = pneg %p63
        %p191 = pneg %p60
        %p192 = pneg %p84
        %p193 = pneg %p81
        %p194 = pneg %p110
        %p195 = pneg %p107
        %s196 = sand.u32 %s97, 1
        %s197 = scalar_lea.sflag [#allocation4], %s196
        %s198 = sand.u32 %s97, 1
        %s199 = smul.addr %s198, 8
        %s200 = scalar_lea.vmem [#allocation7], %s199
        %v201 = vld [vmem:[%s174] sm:$0xff]
        %v202 = vld [vmem:[#allocation5] sm:$0xff]
        %v203 = vld [vmem:[#allocation5 + $0x8] sm:$0xff]
        %v204 = vld [vmem:[#allocation5 + $0x10] sm:$0xff]
        %v205 = vld [vmem:[#allocation5 + $0x18] sm:$0xff]
        %v206 = vld [vmem:[#allocation5 + $0x20] sm:$0xff]
        %v207 = vld [vmem:[#allocation5 + $0x28] sm:$0xff]
        %v208 = vld [vmem:[#allocation5 + $0x30] sm:$0xff]
        %v209 = vld [vmem:[#allocation5 + $0x38] sm:$0xff]
        %v210 = vld [vmem:[#allocation5 + $0x40] sm:$0xff]
        %v211 = vld [vmem:[#allocation5 + $0x48] sm:$0xff]
        %v212 = vld [vmem:[#allocation5 + $0x50] sm:$0xff]
        %v213 = vld [vmem:[#allocation5 + $0x58] sm:$0xff]
        %v214 = vld [vmem:[#allocation5 + $0x60] sm:$0xff]
        %v215 = vld [vmem:[#allocation5 + $0x68] sm:$0xff]
        %v216 = vld [vmem:[#allocation5 + $0x70] sm:$0xff]
        %v217 = vld [vmem:[#allocation5 + $0x78] sm:$0xff]
        %v218 = vld [vmem:[#allocation5 + $0x80] sm:$0xff]
        %v219 = vld [vmem:[#allocation5 + $0x88] sm:$0xff]
        %v220 = vld [vmem:[#allocation5 + $0x90] sm:$0xff]
        %v221 = vld [vmem:[#allocation5 + $0x98] sm:$0xff]
        %v222 = vld [vmem:[#allocation5 + $0xa0] sm:$0xff]
        %v223 = vld [vmem:[#allocation5 + $0xa8] sm:$0xff]
        %v224 = vld [vmem:[#allocation5 + $0xb0] sm:$0xff]
        %v225 = vld [vmem:[#allocation5 + $0xb8] sm:$0xff]
        %v226 = vld [vmem:[#allocation5 + $0xc0] sm:$0xff]
        %v227 = vld [vmem:[#allocation5 + $0xc8] sm:$0xff]
        %v228 = vld [vmem:[#allocation5 + $0xd0] sm:$0xff]
        %v229 = vld [vmem:[#allocation5 + $0xd8] sm:$0xff]
        %v230 = vld [vmem:[#allocation5 + $0xe0] sm:$0xff]
        %v231 = vld [vmem:[#allocation5 + $0xe8] sm:$0xff]
        %v232 = vld [vmem:[#allocation5 + $0xf0] sm:$0xff]
        %v233 = vld [vmem:[#allocation5 + $0xf8] sm:$0xff]
        %v234 = vld [vmem:[%s2] sm:$0x3]
        %v236 = vlaneseq
        %v237 = vshrl.u32 %v236, 7
        %v238 = vsub.s32 0, %v237
        %v239 = vrot.slane %v234, %v238
        %v240 = vlaneseq
        %v241 = vshrl.u32 %v240, 7
        %v242 = vsub.s32 1, %v241
        %v243 = vrot.slane %v234, %v242
        %246 = vmatprep.subr.mxu0 %v233
        %247 = vmatpush1.msra.mxu0 %v232
        %248 = vmatprep.subr.mxu0 %v231
        %249 = vmatpush1.msra.mxu0 %v230
        %250 = vmatprep.subr.mxu0 %v229
        %251 = vmatpush1.msra.mxu0 %v228
        %252 = vmatprep.subr.mxu0 %v227
        %253 = vmatpush1.msra.mxu0 %v226
        %254 = vmatprep.subr.mxu0 %v225
        %255 = vmatpush1.msra.mxu0 %v224
        %256 = vmatprep.subr.mxu0 %v223
        %257 = vmatpush1.msra.mxu0 %v222
        %258 = vmatprep.subr.mxu0 %v221
        %259 = vmatpush1.msra.mxu0 %v220
        %260 = vmatprep.subr.mxu0 %v219
        %261 = vmatpush1.msra.mxu0 %v218
        %262 = vmatprep.subr.mxu0 %v217
        %263 = vmatpush1.msra.mxu0 %v216
        %264 = vmatprep.subr.mxu0 %v215
        %265 = vmatpush1.msra.mxu0 %v214
        %266 = vmatprep.subr.mxu0 %v213
        %267 = vmatpush1.msra.mxu0 %v212
        %268 = vmatprep.subr.mxu0 %v211
        %269 = vmatpush1.msra.mxu0 %v210
        %270 = vmatprep.subr.mxu0 %v209
        %271 = vmatpush1.msra.mxu0 %v208
        %272 = vmatprep.subr.mxu0 %v207
        %273 = vmatpush1.msra.mxu0 %v206
        %274 = vmatprep.subr.mxu0 %v205
        %275 = vmatpush1.msra.mxu0 %v204
        %276 = vmatprep.subr.mxu0 %v203
        %277 = vmatpush1.msra.mxu0 %v202
        %278 = vmatprep.subr.mxu0 0.0
        %279 = vmatpush2.msra.mxu0 0.0
        %280 = vmatprep.subr.mxu0 0.0
        %281 = vmatpush2.msra.mxu0 0.0
        %282 = vmatprep.subr.mxu0 0.0
        %283 = vmatpush2.msra.mxu0 0.0
        %284 = vmatprep.subr.mxu0 0.0
        %285 = vmatpush2.msra.mxu0 0.0
        %286 = vmatprep.subr.mxu0 0.0
        %287 = vmatpush2.msra.mxu0 0.0
        %288 = vmatprep.subr.mxu0 0.0
        %289 = vmatpush2.msra.mxu0 0.0
        %290 = vmatprep.subr.mxu0 0.0
        %291 = vmatpush2.msra.mxu0 0.0
        %292 = vmatprep.subr.mxu0 0.0
        %293 = vmatpush2.msra.mxu0 0.0
        %294 = vmatprep.subr.mxu0 0.0
        %295 = vmatpush2.msra.mxu0 0.0
        %296 = vmatprep.subr.mxu0 0.0
        %297 = vmatpush2.msra.mxu0 0.0
        %298 = vmatprep.subr.mxu0 0.0
        %299 = vmatpush2.msra.mxu0 0.0
        %300 = vmatprep.subr.mxu0 0.0
        %301 = vmatpush2.msra.mxu0 0.0
        %302 = vmatprep.subr.mxu0 0.0
        %303 = vmatpush2.msra.mxu0 0.0
        %304 = vmatprep.subr.mxu0 0.0
        %305 = vmatpush2.msra.mxu0 0.0
        %306 = vmatprep.subr.mxu0 0.0
        %307 = vmatpush2.msra.mxu0 0.0
        %308 = vmatprep.subr.mxu0 0.0
        %309 = vmatpush2.msra.mxu0 0.0
        %310 = vmatprep.mubr.f32.mxu0 0.0
        %311 = vmatmul.mubr.f32.gmra.mxu0 %v201
        %v312 = vpop.f32.mrf.mxu0
        %v313 = vadd.f32 %v239, %v312
        %v314 = vpop.f32.mrf.mxu0
        %v315 = vadd.f32 %v243, %v314
        %316 = vdwg.mxu0
        %v317 = vmax.f32 %v313, 0.0
        %v318 = vxor.u32 %v315, 2147483648
        %v319 = vmul.f32 %v318, 1.442695
        %v320 = vpow.pop %v319
        %v321 = vadd.f32 %v320, 1.0
        %v322 = vrcp.pop %v321
        %v323 = vmul.f32 1.0, %v322
        %v324 = vsub.f32 %v317, %v201
        %v325 = vmul.f32 %v323, %v324
        %v326 = vadd.f32 %v201, %v325
        %327 = vst [vmem:[%s200] sm:$0xff] %v326
        %s328 = sand.u32 %s97, 1
        %s329 = scalar_lea.sflag [#allocation4], %s328
        %s330 = sand.u32 %s97, 1
        %s331 = smul.addr %s330, 8
        %s332 = scalar_lea.vmem [#allocation7], %s331
        // Predicated region
        $region41: #{tpu_custom_call.1} parent=31 // pred_check
          %p333 = pneg %p107
        $region42: #{tpu_custom_call.1} parent=31 // pred_check_branch
          %335 = sbr.rel (%p333) target = $region44
        $region43: #{tpu_custom_call.1} parent=31 // pred_region
          %s337 = ssub.s32 128, 128
          %338 = vsyncadd %s329, %s337
          %s339 = smul.addr %s21, 128
          %s340 = scalar_lea.hbm %s3, %s339
          %s342 = sshll.u32 %s332, 4
          %s343 = int_to_ptr.vmem [resolvable:$true] %s342
          %345 = dma.vmem_to_hbm [thread:$0]  %s343, 128, %s340, %s329
        $region44: #{tpu_custom_call.1} parent=31 // pred_fallthru
          _
      $region32: #{tpu_custom_call.1} parent=5 // pred_fallthru
        _
      %p346 = scmp.le.s32.totalorder 2, %s16
      // Predicated region
      $region45: #{tpu_custom_call.1} parent=5 // pred_check
        %p347 = pneg %p346
      $region46: #{tpu_custom_call.1} parent=5 // pred_check_branch
        %349 = sbr.rel (%p347) target = $region48
      $region47: #{tpu_custom_call.1} parent=5 // pred_region
        %s350 = ssub.s32 %s16, 2
        // Predicated region
        $region49: #{tpu_custom_call.1} parent=47 // pred_check
          %p351 = pneg %p113
        $region50: #{tpu_custom_call.1} parent=47 // pred_check_branch
          %353 = sbr.rel (%p351) target = $region52
        $region51: #{tpu_custom_call.1} parent=47 // pred_region
          %s354 = sand.u32 %s98, 1
          %s355 = scalar_lea.sflag [#allocation4], %s354
          %s356 = sand.u32 %s98, 1
          %s357 = smul.addr %s356, 8
          %s358 = scalar_lea.vmem [#allocation7], %s357
          %359 = dma.done %s355, 128
        $region52: #{tpu_custom_call.1} parent=47 // pred_fallthru
          _
      $region48: #{tpu_custom_call.1} parent=5 // pred_fallthru
        _
    $region6: #{tpu_custom_call.1} parent=1 // loop_footer
      %s20 = sadd.s32 1, %s16
    $region7: #{tpu_custom_call.1} parent=1 // loop_footer_branch
      %15 = sbr.rel target = $region3
    $region8: #{tpu_custom_call.1} parent=1 // loop_exit
      _
    %360 = vsyncpa [#allocation3], 1
    %s361 = scalar_lea.sflag [#allocation3], 1
    %362 = vsyncpa %s361, 1
    %363 = vsyncpa [#allocation6], 1
    %364 = vsyncpa [#allocation4], 1
    %s365 = scalar_lea.sflag [#allocation4], 1
    %366 = vsyncpa %s365, 1

</llo_original>
